<compile_context>
chip_gen: v7x
topology: tpu7x:2x2x1
jax: 0.10.0
libtpu: 0.0.40
codegen_flags: <defaults>
</compile_context>

<pallas_src>
import functools

import jax
import jax.numpy as jnp
from jax.experimental import pallas as pl
from jax.experimental.pallas import tpu as pltpu


def _layernorm_kernel(x_ref, w_ref, b_ref, o_ref, *, std_eps, hidden, groups):
    # x_ref: [tile_rows, groups*hidden]; w_ref/b_ref: [1, groups*hidden]
    # (weight/bias tiled `groups` times along lanes).
    x = x_ref[...].astype(jnp.float32)
    outs = []
    for g in range(groups):
        seg = x[:, g * hidden:(g + 1) * hidden]          # one original row per segment
        u = jnp.mean(seg, axis=-1, keepdims=True)
        d = seg - u
        # torch.Tensor.std uses the unbiased estimator (divide by N-1).
        var = jnp.sum(d * d, axis=-1, keepdims=True) / (hidden - 1)
        denom = jnp.sqrt(var) + std_eps
        # Approx reciprocal runs on the EUP (separate VLIW slot); one Newton
        # step restores full f32 accuracy vs the exact-divide reference.
        inv = pl.reciprocal(denom, approx=True)
        inv = inv * (2.0 - denom * inv)
        outs.append(d * inv)
    y = outs[0] if groups == 1 else jnp.concatenate(outs, axis=-1)
    out = w_ref[...].astype(jnp.float32) * y + b_ref[...].astype(jnp.float32)
    o_ref[...] = out.astype(o_ref.dtype)


_TARGET_TILE_ROWS = 1024          # mem-bound sweet spot (512->85%, 1024->86% of roofline)
_SMALL_TILE_BYTES = 2 << 20       # below this, triple-buffer the x input


def _vmem_params():
    """Generation-aware scoped-VMEM limit + per-kernel tile budget."""
    cap = 64 << 20                                   # conservative fallback (v7x physical)
    try:
        info = pltpu.get_tpu_info()
        cap = int(getattr(info, "vmem_capacity_bytes", cap) or cap)
    except Exception:
        pass
    # v7x (64 MiB physical) -> 48 MiB limit; v5e/v6e (128 MiB) -> 96 MiB.
    limit = min((cap * 3) // 4, 96 << 20)
    budget = limit // 2                              # double-buffered in+out tiles must fit
    return limit, budget


def _pick_tile_rows(rows, lane_width, itemsize, tile_budget):
    """Largest aligned row tile <= target that fits VMEM and keeps >=2 tiles."""
    align = 8 * max(1, 4 // itemsize)                # f32: 8 rows, bf16: 16 (sublane packing)
    per_row = 4 * lane_width * itemsize              # 2 input bufs + 2 output bufs
    budget_rows = max(align, tile_budget // per_row)
    tile = min(_TARGET_TILE_ROWS, budget_rows)
    if rows > 64:
        # v7x megacore: keep at least 2 tiles so the "parallel" grid uses both TCs.
        half = ((pl.cdiv(rows, 2) + align - 1) // align) * align
        tile = min(tile, half)
    if rows <= tile:
        return rows                                  # single/full block (== full dim -> legal)
    return max(align, (tile // align) * align)


def _x_block_spec(tile_rows, lane_width, triple_buffer):
    if triple_buffer:
        try:
            return pl.BlockSpec((tile_rows, lane_width), lambda i: (i, 0),
                                pipeline_mode=pl.Buffered(3))
        except TypeError:                            # older BlockSpec without pipeline_mode
            pass
    return pl.BlockSpec((tile_rows, lane_width), lambda i: (i, 0))


def layer_norm(x, weight, bias, std_eps=1e-6, *, tile_rows=None):
    """TF-style LayerNorm matching the reference PyTorch module.

    x: [..., hidden]; weight, bias: [hidden].
    """
    orig_shape = x.shape
    hidden = orig_shape[-1]
    x2d = x.reshape(-1, hidden)
    rows = x2d.shape[0]

    # Lane-dense folding for small hidden: pack g consecutive rows into the
    # 128-lane axis.  Pure row-major reshape -> no extra HBM traffic.
    groups = 1
    if hidden < 128 and 128 % hidden == 0:
        g = 128 // hidden
        if rows % g == 0:
            groups = g
    lane_width = groups * hidden
    rows_k = rows // groups
    xk = x2d.reshape(rows_k, lane_width)

    w2d = weight.reshape(1, hidden)
    b2d = bias.reshape(1, hidden)
    if groups > 1:
        w2d = jnp.tile(w2d, (1, groups))
        b2d = jnp.tile(b2d, (1, groups))

    itemsize = x2d.dtype.itemsize
    vmem_limit, tile_budget = _vmem_params()
    if tile_rows is None:
        tile_rows = _pick_tile_rows(rows_k, lane_width, itemsize, tile_budget)
    tile_rows = max(1, min(int(tile_rows), rows_k))

    # cdiv grid, ragged last block (no pad / no output slice).
    num_tiles = pl.cdiv(rows_k, tile_rows)
    grid = (num_tiles,)

    small_tile = (tile_rows * lane_width * itemsize <= _SMALL_TILE_BYTES) and num_tiles > 1
    kernel = functools.partial(_layernorm_kernel, std_eps=std_eps,
                               hidden=hidden, groups=groups)

    outk = pl.pallas_call(
        kernel,
        out_shape=jax.ShapeDtypeStruct((rows_k, lane_width), x.dtype),
        grid_spec=pl.GridSpec(
            grid=grid,
            in_specs=[
                _x_block_spec(tile_rows, lane_width, small_tile),
                pl.BlockSpec((1, lane_width), lambda i: (0, 0)),
                pl.BlockSpec((1, lane_width), lambda i: (0, 0)),
            ],
            out_specs=pl.BlockSpec((tile_rows, lane_width), lambda i: (i, 0)),
        ),
        compiler_params=pltpu.CompilerParams(
            dimension_semantics=("parallel",),       # shards row tiles across v7x's 2 TCs
            vmem_limit_bytes=vmem_limit,
        ),
    )(xk, w2d, b2d)

    return outk.reshape(orig_shape)


def layer_norm_ref(x, weight, bias, std_eps=1e-6):
    """Pure-JAX reference mirroring the PyTorch module exactly."""
    x32 = x.astype(jnp.float32)
    u = jnp.mean(x32, axis=-1, keepdims=True)
    d = x32 - u
    n = x32.shape[-1]
    s = jnp.sqrt(jnp.sum(d * d, axis=-1, keepdims=True) / (n - 1))
    y = d / (s + std_eps)
    return (weight.astype(jnp.float32) * y + bias.astype(jnp.float32)).astype(x.dtype)


if __name__ == "__main__":
    key = jax.random.PRNGKey(0)
    k1, k2, k3, k4 = jax.random.split(key, 4)

    # Case 1: module-spec shape (batch=2, seq=8, hidden=32), ones/zeros params.
    # Exercises the folded lane-dense path ([16,32] -> [4,128]).
    x1 = jax.random.normal(k1, (2, 8, 32), dtype=jnp.float32)
    w1 = jnp.ones((32,), jnp.float32)                # nn.Parameter(torch.ones)
    b1 = jnp.zeros((32,), jnp.float32)               # nn.Parameter(torch.zeros)
    o1 = jax.block_until_ready(layer_norm(x1, w1, b1, std_eps=1e-6))
    r1 = layer_norm_ref(x1, w1, b1, std_eps=1e-6)
    assert o1.shape == x1.shape
    assert jnp.allclose(o1, r1, atol=3e-5, rtol=3e-5), "mismatch (case 1)"

    # Case 2: lane-dense hidden=256, 2000 rows -> two even 1000-row tiles.
    x2 = jax.random.normal(k2, (2000, 256), dtype=jnp.float32)
    w2 = 1.0 + 0.1 * jax.random.normal(k3, (256,), jnp.float32)
    b2 = 0.1 * jax.random.normal(k4, (256,), jnp.float32)
    o2 = jax.block_until_ready(layer_norm(x2, w2, b2, std_eps=1e-6))
    assert jnp.allclose(o2, layer_norm_ref(x2, w2, b2), atol=3e-5, rtol=3e-5), "mismatch (case 2)"

    # Case 3: folded small hidden + ragged last tile (no wrapper pad/slice).
    x3 = jax.random.normal(k2, (520, 32), dtype=jnp.float32)
    w3 = 1.0 + 0.1 * jax.random.normal(k3, (32,), jnp.float32)
    b3 = 0.1 * jax.random.normal(k4, (32,), jnp.float32)
    o3 = jax.block_until_ready(layer_norm(x3, w3, b3, std_eps=1e-6))
    assert jnp.allclose(o3, layer_norm_ref(x3, w3, b3), atol=3e-5, rtol=3e-5), "mismatch (case 3)"

    # Case 4: bf16 activations (half the HBM traffic), ragged tiles, f32 params.
    x4 = jax.random.normal(k1, (300, 256), dtype=jnp.bfloat16)
    w4 = jnp.ones((256,), jnp.float32)
    b4 = jnp.zeros((256,), jnp.float32)
    o4 = jax.block_until_ready(layer_norm(x4, w4, b4, std_eps=1e-6))
    r4 = layer_norm_ref(x4, w4, b4, std_eps=1e-6)
    assert o4.dtype == jnp.bfloat16
    assert jnp.allclose(o4.astype(jnp.float32), r4.astype(jnp.float32),
                        atol=2e-2, rtol=2e-2), "mismatch (case 4)"

    print("KERNEL_OK")
</pallas_src>

<mosaic_0001>
module attributes {stable_mosaic.version = 11 : i64} {
  func.func @_layernorm_kernel(%arg0: i32, %arg1: memref<4x128xf32, #tpu.memory_space<vmem>>, %arg2: memref<1x128xf32, #tpu.memory_space<vmem>>, %arg3: memref<1x128xf32, #tpu.memory_space<vmem>>, %arg4: memref<4x128xf32, #tpu.memory_space<vmem>>) attributes {dimension_semantics = [#tpu.dimension_semantics<parallel>], iteration_bounds = array<i64: 1>, scalar_prefetch = 0 : i64, scratch_operands = 0 : i64, tpu.core_type = #tpu.core_type<tc>, window_params = [{transform_indices = @transform_0, window_bounds = array<i64: 4, 128>}, {pipeline_mode = #tpu.pipeline_mode<synchronous>, transform_indices = @transform_1, window_bounds = array<i64: 1, 128>}, {pipeline_mode = #tpu.pipeline_mode<synchronous>, transform_indices = @transform_2, window_bounds = array<i64: 1, 128>}, {transform_indices = @transform_3, window_bounds = array<i64: 4, 128>}]} {
    %c0 = arith.constant 0 : index
    %c0_0 = arith.constant 0 : index
    %0 = vector.load %arg1[%c0, %c0_0] : memref<4x128xf32, #tpu.memory_space<vmem>>, vector<4x128xf32>
    %1 = vector.extract_strided_slice %0 {offsets = [0, 0], sizes = [4, 32], strides = [1, 1]} : vector<4x128xf32> to vector<4x32xf32>
    %cst = arith.constant dense<0.000000e+00> : vector<4xf32>
    %2 = vector.multi_reduction <add>, %1, %cst [1] : vector<4x32xf32> to vector<4xf32>
    %3 = vector.shape_cast %2 : vector<4xf32> to vector<4x1xf32>
    %cst_1 = arith.constant 3.200000e+01 : f32
    %4 = vector.broadcast %cst_1 : f32 to vector<4x1xf32>
    %5 = arith.divf %3, %4 : vector<4x1xf32>
    %6 = vector.broadcast %5 : vector<4x1xf32> to vector<4x32xf32>
    %7 = arith.subf %1, %6 : vector<4x32xf32>
    %8 = arith.mulf %7, %7 : vector<4x32xf32>
    %cst_2 = arith.constant dense<0.000000e+00> : vector<4xf32>
    %9 = vector.multi_reduction <add>, %8, %cst_2 [1] : vector<4x32xf32> to vector<4xf32>
    %10 = vector.shape_cast %9 : vector<4xf32> to vector<4x1xf32>
    %cst_3 = arith.constant 3.100000e+01 : f32
    %11 = vector.broadcast %cst_3 : f32 to vector<4x1xf32>
    %12 = arith.divf %10, %11 : vector<4x1xf32>
    %13 = math.sqrt %12 : vector<4x1xf32>
    %cst_4 = arith.constant 9.99999997E-7 : f32
    %14 = vector.broadcast %cst_4 : f32 to vector<4x1xf32>
    %15 = arith.addf %13, %14 : vector<4x1xf32>
    %16 = tpu.reciprocal %15 {approx = true} : vector<4x1xf32> -> vector<4x1xf32>
    %17 = arith.mulf %15, %16 : vector<4x1xf32>
    %cst_5 = arith.constant 2.000000e+00 : f32
    %18 = vector.broadcast %cst_5 : f32 to vector<4x1xf32>
    %19 = arith.subf %18, %17 : vector<4x1xf32>
    %20 = arith.mulf %16, %19 : vector<4x1xf32>
    %21 = vector.broadcast %20 : vector<4x1xf32> to vector<4x32xf32>
    %22 = arith.mulf %7, %21 : vector<4x32xf32>
    %23 = vector.extract_strided_slice %0 {offsets = [0, 32], sizes = [4, 32], strides = [1, 1]} : vector<4x128xf32> to vector<4x32xf32>
    %cst_6 = arith.constant dense<0.000000e+00> : vector<4xf32>
    %24 = vector.multi_reduction <add>, %23, %cst_6 [1] : vector<4x32xf32> to vector<4xf32>
    %25 = vector.shape_cast %24 : vector<4xf32> to vector<4x1xf32>
    %cst_7 = arith.constant 3.200000e+01 : f32
    %26 = vector.broadcast %cst_7 : f32 to vector<4x1xf32>
    %27 = arith.divf %25, %26 : vector<4x1xf32>
    %28 = vector.broadcast %27 : vector<4x1xf32> to vector<4x32xf32>
    %29 = arith.subf %23, %28 : vector<4x32xf32>
    %30 = arith.mulf %29, %29 : vector<4x32xf32>
    %cst_8 = arith.constant dense<0.000000e+00> : vector<4xf32>
    %31 = vector.multi_reduction <add>, %30, %cst_8 [1] : vector<4x32xf32> to vector<4xf32>
    %32 = vector.shape_cast %31 : vector<4xf32> to vector<4x1xf32>
    %cst_9 = arith.constant 3.100000e+01 : f32
    %33 = vector.broadcast %cst_9 : f32 to vector<4x1xf32>
    %34 = arith.divf %32, %33 : vector<4x1xf32>
    %35 = math.sqrt %34 : vector<4x1xf32>
    %cst_10 = arith.constant 9.99999997E-7 : f32
    %36 = vector.broadcast %cst_10 : f32 to vector<4x1xf32>
    %37 = arith.addf %35, %36 : vector<4x1xf32>
    %38 = tpu.reciprocal %37 {approx = true} : vector<4x1xf32> -> vector<4x1xf32>
    %39 = arith.mulf %37, %38 : vector<4x1xf32>
    %cst_11 = arith.constant 2.000000e+00 : f32
    %40 = vector.broadcast %cst_11 : f32 to vector<4x1xf32>
    %41 = arith.subf %40, %39 : vector<4x1xf32>
    %42 = arith.mulf %38, %41 : vector<4x1xf32>
    %43 = vector.broadcast %42 : vector<4x1xf32> to vector<4x32xf32>
    %44 = arith.mulf %29, %43 : vector<4x32xf32>
    %45 = vector.extract_strided_slice %0 {offsets = [0, 64], sizes = [4, 32], strides = [1, 1]} : vector<4x128xf32> to vector<4x32xf32>
    %cst_12 = arith.constant dense<0.000000e+00> : vector<4xf32>
    %46 = vector.multi_reduction <add>, %45, %cst_12 [1] : vector<4x32xf32> to vector<4xf32>
    %47 = vector.shape_cast %46 : vector<4xf32> to vector<4x1xf32>
    %cst_13 = arith.constant 3.200000e+01 : f32
    %48 = vector.broadcast %cst_13 : f32 to vector<4x1xf32>
    %49 = arith.divf %47, %48 : vector<4x1xf32>
    %50 = vector.broadcast %49 : vector<4x1xf32> to vector<4x32xf32>
    %51 = arith.subf %45, %50 : vector<4x32xf32>
    %52 = arith.mulf %51, %51 : vector<4x32xf32>
    %cst_14 = arith.constant dense<0.000000e+00> : vector<4xf32>
    %53 = vector.multi_reduction <add>, %52, %cst_14 [1] : vector<4x32xf32> to vector<4xf32>
    %54 = vector.shape_cast %53 : vector<4xf32> to vector<4x1xf32>
    %cst_15 = arith.constant 3.100000e+01 : f32
    %55 = vector.broadcast %cst_15 : f32 to vector<4x1xf32>
    %56 = arith.divf %54, %55 : vector<4x1xf32>
    %57 = math.sqrt %56 : vector<4x1xf32>
    %cst_16 = arith.constant 9.99999997E-7 : f32
    %58 = vector.broadcast %cst_16 : f32 to vector<4x1xf32>
    %59 = arith.addf %57, %58 : vector<4x1xf32>
    %60 = tpu.reciprocal %59 {approx = true} : vector<4x1xf32> -> vector<4x1xf32>
    %61 = arith.mulf %59, %60 : vector<4x1xf32>
    %cst_17 = arith.constant 2.000000e+00 : f32
    %62 = vector.broadcast %cst_17 : f32 to vector<4x1xf32>
    %63 = arith.subf %62, %61 : vector<4x1xf32>
    %64 = arith.mulf %60, %63 : vector<4x1xf32>
    %65 = vector.broadcast %64 : vector<4x1xf32> to vector<4x32xf32>
    %66 = arith.mulf %51, %65 : vector<4x32xf32>
    %67 = vector.extract_strided_slice %0 {offsets = [0, 96], sizes = [4, 32], strides = [1, 1]} : vector<4x128xf32> to vector<4x32xf32>
    %cst_18 = arith.constant dense<0.000000e+00> : vector<4xf32>
    %68 = vector.multi_reduction <add>, %67, %cst_18 [1] : vector<4x32xf32> to vector<4xf32>
    %69 = vector.shape_cast %68 : vector<4xf32> to vector<4x1xf32>
    %cst_19 = arith.constant 3.200000e+01 : f32
    %70 = vector.broadcast %cst_19 : f32 to vector<4x1xf32>
    %71 = arith.divf %69, %70 : vector<4x1xf32>
    %72 = vector.broadcast %71 : vector<4x1xf32> to vector<4x32xf32>
    %73 = arith.subf %67, %72 : vector<4x32xf32>
    %74 = arith.mulf %73, %73 : vector<4x32xf32>
    %cst_20 = arith.constant dense<0.000000e+00> : vector<4xf32>
    %75 = vector.multi_reduction <add>, %74, %cst_20 [1] : vector<4x32xf32> to vector<4xf32>
    %76 = vector.shape_cast %75 : vector<4xf32> to vector<4x1xf32>
    %cst_21 = arith.constant 3.100000e+01 : f32
    %77 = vector.broadcast %cst_21 : f32 to vector<4x1xf32>
    %78 = arith.divf %76, %77 : vector<4x1xf32>
    %79 = math.sqrt %78 : vector<4x1xf32>
    %cst_22 = arith.constant 9.99999997E-7 : f32
    %80 = vector.broadcast %cst_22 : f32 to vector<4x1xf32>
    %81 = arith.addf %79, %80 : vector<4x1xf32>
    %82 = tpu.reciprocal %81 {approx = true} : vector<4x1xf32> -> vector<4x1xf32>
    %83 = arith.mulf %81, %82 : vector<4x1xf32>
    %cst_23 = arith.constant 2.000000e+00 : f32
    %84 = vector.broadcast %cst_23 : f32 to vector<4x1xf32>
    %85 = arith.subf %84, %83 : vector<4x1xf32>
    %86 = arith.mulf %82, %85 : vector<4x1xf32>
    %87 = vector.broadcast %86 : vector<4x1xf32> to vector<4x32xf32>
    %88 = arith.mulf %73, %87 : vector<4x32xf32>
    %89 = tpu.concatenate %22, %44, %66, %88 in 1 : vector<4x32xf32>, vector<4x32xf32>, vector<4x32xf32>, vector<4x32xf32> -> vector<4x128xf32>
    %c0_24 = arith.constant 0 : index
    %c0_25 = arith.constant 0 : index
    %90 = vector.load %arg2[%c0_24, %c0_25] : memref<1x128xf32, #tpu.memory_space<vmem>>, vector<1x128xf32>
    %91 = vector.broadcast %90 : vector<1x128xf32> to vector<4x128xf32>
    %92 = arith.mulf %91, %89 : vector<4x128xf32>
    %c0_26 = arith.constant 0 : index
    %c0_27 = arith.constant 0 : index
    %93 = vector.load %arg3[%c0_26, %c0_27] : memref<1x128xf32, #tpu.memory_space<vmem>>, vector<1x128xf32>
    %94 = vector.broadcast %93 : vector<1x128xf32> to vector<4x128xf32>
    %95 = arith.addf %92, %94 : vector<4x128xf32>
    %c0_28 = arith.constant 0 : index
    %c0_29 = arith.constant 0 : index
    %96 = vector.load %arg4[%c0_28, %c0_29] : memref<4x128xf32, #tpu.memory_space<vmem>>, vector<4x128xf32>
    tpu.vector_store %arg4[%c0_28, %c0_29], %95 {strides = array<i32>} : memref<4x128xf32, #tpu.memory_space<vmem>>, vector<4x128xf32>,
    return
  }
  func.func @transform_0(%arg0: i32) -> (i32, i32) {
    %c0_i32 = arith.constant 0 : i32
    %c0_i32_0 = arith.constant 0 : i32
    return %arg0, %c0_i32 : i32, i32
  }
  func.func @transform_1(%arg0: i32) -> (i32, i32) {
    %c0_i32 = arith.constant 0 : i32
    %c0_i32_0 = arith.constant 0 : i32
    %c0_i32_1 = arith.constant 0 : i32
    return %c0_i32, %c0_i32_0 : i32, i32
  }
  func.func @transform_2(%arg0: i32) -> (i32, i32) {
    %c0_i32 = arith.constant 0 : i32
    %c0_i32_0 = arith.constant 0 : i32
    %c0_i32_1 = arith.constant 0 : i32
    return %c0_i32, %c0_i32_0 : i32, i32
  }
  func.func @transform_3(%arg0: i32) -> (i32, i32) {
    %c0_i32 = arith.constant 0 : i32
    %c0_i32_0 = arith.constant 0 : i32
    return %arg0, %c0_i32 : i32, i32
  }
}

</mosaic_0001>

<llo_original>
// kernel: tpu_custom_call.1
$region0: #{tpu_custom_call.1}
  #allocation0 [shape = 'u32[]', space=smem, size = 0x4, offset = 0x4, fixed_abs, tag = 'smem constant byte address 0x4 - core index']
  #allocation1 [shape = 'u32[144,128]{1,0:T(1,128)}', space=vmem, size = 0x12000, scoped, tag = 'internal scratch']
  %s0 = inlined_call_operand.hbm [shape: f32[4,128], index: 0, kind: input, shape index: {}]
  %s1 = inlined_call_operand.vmem [shape: f32[1,128], index: 1, kind: input, shape index: {}]
  %s2 = inlined_call_operand.vmem [shape: f32[1,128], index: 2, kind: input, shape index: {}]
  %s3 = inlined_call_operand.hbm [shape: f32[4,128], index: 3, kind: output, shape index: {}]
  %s4 = sld [smem:[#allocation0]]
  $region26: #{tpu_custom_call.1} parent=0
    _
  %s6 = ssub.s32 1, %s4
  %s7 = scalar_select 0, %s6, %s4
  $region1: #{tpu_custom_call.1} parent=0
    #allocation2 [shape = 'u8[2048]{0}', space=vmem, size = 0x800, scoped, tag = 'input window, operand 0, single buffered']
    #allocation3 [shape = 's32[1]{0}', space=sflag, size = 0x4, scoped, tag = 'scoped memory for tpu_custom_call.1']
    #allocation4 [shape = 's32[1]{0}', space=sflag, size = 0x4, scoped, tag = 'scoped memory for tpu_custom_call.1']
    #allocation5 [shape = 'u8[2048]{0}', space=vmem, size = 0x800, scoped, tag = 'output window, operand 0, single buffered']
    %8 = vsyncpa [#allocation3], 0
    %9 = vsyncpa [#allocation4], 0
    // Predicated region
    $region2: #{tpu_custom_call.1} parent=1 // pred_check
      _
    $region3: #{tpu_custom_call.1} parent=1 // pred_check_branch
      %11 = sbr.rel (0) target = $region5
    $region4: #{tpu_custom_call.1} parent=1 // pred_region
      %s13 = ssub.s32 64, 64
      %14 = vsyncadd [#allocation3], %s13
      %s16 = sshll.u32 [#allocation2], 4
      %s17 = int_to_ptr.vmem [resolvable:$true] %s16
      %19 = dma.hbm_to_vmem [thread:$0]  %s0, 64, %s17, [#allocation3]
    $region5: #{tpu_custom_call.1} parent=1 // pred_fallthru
      _
    // Predicated region
    $region6: #{tpu_custom_call.1} parent=1 // pred_check
      _
    $region7: #{tpu_custom_call.1} parent=1 // pred_check_branch
      %21 = sbr.rel (0) target = $region9
    $region8: #{tpu_custom_call.1} parent=1 // pred_region
      _
    $region9: #{tpu_custom_call.1} parent=1 // pred_fallthru
      _
    // Predicated region
    $region10: #{tpu_custom_call.1} parent=1 // pred_check
      _
    $region11: #{tpu_custom_call.1} parent=1 // pred_check_branch
      %23 = sbr.rel (0) target = $region13
    $region12: #{tpu_custom_call.1} parent=1 // pred_region
      _
    $region13: #{tpu_custom_call.1} parent=1 // pred_fallthru
      _
    // Predicated region
    $region14: #{tpu_custom_call.1} parent=1 // pred_check
      _
    $region15: #{tpu_custom_call.1} parent=1 // pred_check_branch
      %25 = sbr.rel (0) target = $region17
    $region16: #{tpu_custom_call.1} parent=1 // pred_region
      %26 = dma.done [#allocation3], 64
    $region17: #{tpu_custom_call.1} parent=1 // pred_fallthru
      _
    %v27 = vld [vmem:[#allocation2] sm:$0xf]
    %vm28 = vcmask 257024
    %v29 = vsel %vm28, %v27, 0.0
    %30 = vadd.xlane.f32.xlu0 %v29
    %v31 = vpop.xlane.xlu0 %30
    %v32 = vrcp.pop 32.0
    %v33 = vmul.f32 %v31, %v32
    %v34 = vsub.f32 %v27, %v33
    %v35 = vmul.f32 %v34, %v34
    %v36 = vsel %vm28, %v35, 0.0
    %37 = vadd.xlane.f32.xlu0 %v36
    %v38 = vpop.xlane.xlu0 %37
    %v39 = vrcp.pop 31.0
    %v40 = vmul.f32 %v38, %v39
    %v41 = vrsqrt.pop %v40
    %v42 = vmul.f32 %v40, %v41
    %vm43 = vcmp.eq.f32.partialorder %v40, inf
    %v44 = vsel %vm43, %v40, %v42
    %vm45 = vcmp.eq.f32.partialorder %v40, 0.0
    %v46 = vand.u32 %v40, 2147483648
    %v47 = vsel %vm45, %v46, %v44
    %v48 = vadd.f32 %v47, 1e-06
    %v49 = vrcp.pop %v48
    %v50 = vmul.f32 %v48, %v49
    %v51 = vsub.f32 2.0, %v50
    %v52 = vmul.f32 %v49, %v51
    %v53 = vmul.f32 %v34, %v52
    %55 = vrot.lane.b32.xlu0 %v27, 96
    %v56 = vpop.permute.xlu0 %55
    %v58 = vsel %vm28, %v56, 0.0
    %59 = vadd.xlane.f32.xlu0 %v58
    %v60 = vpop.xlane.xlu0 %59
    %v61 = vmul.f32 %v60, %v32
    %v62 = vsub.f32 %v27, %v61
    %v63 = vmul.f32 %v62, %v62
    %65 = vrot.lane.b32.xlu0 %v63, 96
    %v66 = vpop.permute.xlu0 %65
    %v68 = vsel %vm28, %v66, 0.0
    %69 = vadd.xlane.f32.xlu0 %v68
    %v70 = vpop.xlane.xlu0 %69
    %v71 = vmul.f32 %v70, %v39
    %v72 = vrsqrt.pop %v71
    %v73 = vmul.f32 %v71, %v72
    %vm74 = vcmp.eq.f32.partialorder %v71, inf
    %v75 = vsel %vm74, %v71, %v73
    %vm76 = vcmp.eq.f32.partialorder %v71, 0.0
    %v77 = vand.u32 %v71, 2147483648
    %v78 = vsel %vm76, %v77, %v75
    %v79 = vadd.f32 %v78, 1e-06
    %v80 = vrcp.pop %v79
    %v81 = vmul.f32 %v79, %v80
    %v82 = vsub.f32 2.0, %v81
    %v83 = vmul.f32 %v80, %v82
    %v84 = vmul.f32 %v62, %v83
    %85 = vrot.lane.b32.xlu0 %v27, 64
    %v86 = vpop.permute.xlu0 %85
    %v88 = vsel %vm28, %v86, 0.0
    %89 = vadd.xlane.f32.xlu0 %v88
    %v90 = vpop.xlane.xlu0 %89
    %v91 = vmul.f32 %v90, %v32
    %v92 = vsub.f32 %v27, %v91
    %v93 = vmul.f32 %v92, %v92
    %95 = vrot.lane.b32.xlu0 %v93, 64
    %v96 = vpop.permute.xlu0 %95
    %v98 = vsel %vm28, %v96, 0.0
    %99 = vadd.xlane.f32.xlu0 %v98
    %v100 = vpop.xlane.xlu0 %99
    %v101 = vmul.f32 %v100, %v39
    %v102 = vrsqrt.pop %v101
    %v103 = vmul.f32 %v101, %v102
    %vm104 = vcmp.eq.f32.partialorder %v101, inf
    %v105 = vsel %vm104, %v101, %v103
    %vm106 = vcmp.eq.f32.partialorder %v101, 0.0
    %v107 = vand.u32 %v101, 2147483648
    %v108 = vsel %vm106, %v107, %v105
    %v109 = vadd.f32 %v108, 1e-06
    %v110 = vrcp.pop %v109
    %v111 = vmul.f32 %v109, %v110
    %v112 = vsub.f32 2.0, %v111
    %v113 = vmul.f32 %v110, %v112
    %v114 = vmul.f32 %v92, %v113
    %115 = vrot.lane.b32.xlu0 %v27, 32
    %v116 = vpop.permute.xlu0 %115
    %v118 = vsel %vm28, %v116, 0.0
    %119 = vadd.xlane.f32.xlu0 %v118
    %v120 = vpop.xlane.xlu0 %119
    %v121 = vmul.f32 %v120, %v32
    %v122 = vsub.f32 %v27, %v121
    %v123 = vmul.f32 %v122, %v122
    %125 = vrot.lane.b32.xlu0 %v123, 32
    %v126 = vpop.permute.xlu0 %125
    %v128 = vsel %vm28, %v126, 0.0
    %129 = vadd.xlane.f32.xlu0 %v128
    %v130 = vpop.xlane.xlu0 %129
    %v131 = vmul.f32 %v130, %v39
    %v132 = vrsqrt.pop %v131
    %v133 = vmul.f32 %v131, %v132
    %vm134 = vcmp.eq.f32.partialorder %v131, inf
    %v135 = vsel %vm134, %v131, %v133
    %vm136 = vcmp.eq.f32.partialorder %v131, 0.0
    %v137 = vand.u32 %v131, 2147483648
    %v138 = vsel %vm136, %v137, %v135
    %v139 = vadd.f32 %v138, 1e-06
    %v140 = vrcp.pop %v139
    %v141 = vmul.f32 %v139, %v140
    %v142 = vsub.f32 2.0, %v141
    %v143 = vmul.f32 %v140, %v142
    %v144 = vmul.f32 %v122, %v143
    %vm145 = vcmask 261120
    %v146 = vsel %vm145, %v53, %v84
    %vm147 = vcmask 523264
    %v148 = vsel %vm147, %v146, %v114
    %vm149 = vcmask 785408
    %v150 = vsel %vm149, %v148, %v144
    %v151 = vld [vmem:[%s1] sm:$0x1]
    %v153 = vlaneseq
    %v154 = vshrl.u32 %v153, 7
    %v155 = vsub.s32 0, %v154
    %v156 = vrot.slane %v151, %v155
    %v158 = vmul.f32 %v156, %v150
    %v159 = vld [vmem:[%s2] sm:$0x1]
    %v161 = vlaneseq
    %v162 = vshrl.u32 %v161, 7
    %v163 = vsub.s32 0, %v162
    %v164 = vrot.slane %v159, %v163
    %v166 = vadd.f32 %v158, %v164
    %167 = vst [vmem:[#allocation5] sm:$0xf] %v166
    // Predicated region
    $region18: #{tpu_custom_call.1} parent=1 // pred_check
      _
    $region19: #{tpu_custom_call.1} parent=1 // pred_check_branch
      %169 = sbr.rel (0) target = $region21
    $region20: #{tpu_custom_call.1} parent=1 // pred_region
      %s171 = ssub.s32 64, 64
      %172 = vsyncadd [#allocation4], %s171
      %s174 = sshll.u32 [#allocation5], 4
      %s175 = int_to_ptr.vmem [resolvable:$true] %s174
      %177 = dma.vmem_to_hbm [thread:$0]  %s175, 64, %s3, [#allocation4]
    $region21: #{tpu_custom_call.1} parent=1 // pred_fallthru
      _
    // Predicated region
    $region22: #{tpu_custom_call.1} parent=1 // pred_check
      _
    $region23: #{tpu_custom_call.1} parent=1 // pred_check_branch
      %179 = sbr.rel (0) target = $region25
    $region24: #{tpu_custom_call.1} parent=1 // pred_region
      %180 = dma.done [#allocation4], 64
    $region25: #{tpu_custom_call.1} parent=1 // pred_fallthru
      _
    %181 = vsyncpa [#allocation3], 1
    %182 = vsyncpa [#allocation4], 1

</llo_original>
